<compile_context>
chip_gen: v5e
topology: v5e:2x2
jax: 0.10.0
libtpu: 0.0.40
codegen_flags: <defaults>
</compile_context>

<pallas_src>
import jax
import jax.numpy as jnp
from jax.experimental import pallas as pl
from jax.experimental.pallas import tpu as pltpu

# Keep the pure-JAX reference matmuls in full f32 so the tolerance check is
# meaningful (the kernel always accumulates in f32 via preferred_element_type).
jax.config.update("jax_default_matmul_precision", "highest")


# ----------------------------------------------------------------------------
# Fully fused ContrastiveNet kernel (one grid step processes one batch tile).
# ----------------------------------------------------------------------------
def _make_contrastive_kernel(n_hidden_layers):
    """Kernel refs layout:
       n_hidden == 0:  (z0, z1, w0a(1,D), w0b(1,D), b0(1,1), out(B,1))
       n_hidden >= 1:  (z0, z1, w0a(D,H), w0b(D,H), b0(1,H),
                        [w_i(H,H), b_i(1,H)] * (n_hidden - 1),
                        w_out(1,H), b_out(1,1), out(B,1))
    """

    def kernel(*refs):
        z0 = refs[0][...]
        z1 = refs[1][...]
        o_ref = refs[-1]
        idx = 2

        if n_hidden_layers == 0:
            # Single Linear(2D, 1): weights passed as (1, D) row vectors ->
            # pure lane reduction, no MXU needed.
            w0a, w0b, b0 = refs[idx][...], refs[idx + 1][...], refs[idx + 2][...]
            logits = (jnp.sum(z0 * w0a, axis=-1, keepdims=True)
                      + jnp.sum(z1 * w0b, axis=-1, keepdims=True) + b0)
        else:
            # Linear(2D, H) on cat(z0, z1) == z0 @ W[:D] + z1 @ W[D:]
            w0a, w0b, b0 = refs[idx][...], refs[idx + 1][...], refs[idx + 2][...]
            idx += 3
            h = (jnp.dot(z0, w0a, preferred_element_type=jnp.float32)
                 + jnp.dot(z1, w0b, preferred_element_type=jnp.float32) + b0)
            h = jnp.tanh(h)
            for _ in range(n_hidden_layers - 1):
                w, b = refs[idx][...], refs[idx + 1][...]
                idx += 2
                h = jnp.tanh(jnp.dot(h, w, preferred_element_type=jnp.float32) + b)
            # Final Linear(H, 1) as a lane reduction against a (1, H) weight row.
            w_out, b_out = refs[idx][...], refs[idx + 1][...]
            logits = jnp.sum(h * w_out, axis=-1, keepdims=True) + b_out

        # Sigmoid: exp on the EUP, exact reciprocal to keep 1e-5 accuracy.
        o_ref[...] = 1.0 / (1.0 + jnp.exp(-logits))

    return kernel


# ----------------------------------------------------------------------------
# Parameter init (matches torch.nn.Linear default U(-1/sqrt(fan_in), +...)).
# ----------------------------------------------------------------------------
def init_contrastive_params(key, n_latent_dims=4, n_hidden_layers=1,
                            n_units_per_layer=32):
    # TODO(synk): no checkpoint loading here -- deterministic random init with
    # torch.nn.Linear's default uniform bounds stands in for trained weights.
    if n_hidden_layers == 0:
        dims = [(2 * n_latent_dims, 1)]
    else:
        dims = [(2 * n_latent_dims, n_units_per_layer)]
        dims += [(n_units_per_layer, n_units_per_layer)] * (n_hidden_layers - 1)
        dims += [(n_units_per_layer, 1)]

    params = []
    for fan_in, fan_out in dims:
        key, kw, kb = jax.random.split(key, 3)
        bound = float(fan_in) ** -0.5
        w = jax.random.uniform(kw, (fan_in, fan_out), jnp.float32, -bound, bound)
        b = jax.random.uniform(kb, (fan_out,), jnp.float32, -bound, bound)
        params.append((w, b))
    return params


# ----------------------------------------------------------------------------
# Wrapper: builds the fused pallas_call.
# ----------------------------------------------------------------------------
def contrastive_forward(z0, z1, params, *, block_b=512):
    """sigmoid(MLP(cat(z0, z1, -1))).squeeze() -- single fused Pallas kernel."""
    B, D = z0.shape
    n_hidden_layers = len(params) - 1   # 1 param => 0 hidden, 2 params => 1, ...

    weight_args = []
    if n_hidden_layers == 0:
        (w0, b0), = params                       # w0: (2D, 1)
        weight_args += [w0[:D].T, w0[D:].T, b0.reshape(1, 1)]
    else:
        w0, b0 = params[0]                       # w0: (2D, H)
        H = w0.shape[1]
        weight_args += [w0[:D], w0[D:], b0.reshape(1, H)]
        for w, b in params[1:-1]:                # hidden (H, H) layers
            weight_args += [w, b.reshape(1, H)]
        w_last, b_last = params[-1]              # (H, 1)
        weight_args += [w_last.T, b_last.reshape(1, 1)]

    kernel = _make_contrastive_kernel(n_hidden_layers)

    if B > block_b:
        # Batch-tiled grid for large B.  Pad B to a multiple of the tile so
        # every grid step sees a full, aligned block.
        pad = (-B) % block_b
        if pad:
            z0 = jnp.pad(z0, ((0, pad), (0, 0)))
            z1 = jnp.pad(z1, ((0, pad), (0, 0)))
        Bp = B + pad
        grid = (Bp // block_b,)
        in_specs = ([pl.BlockSpec((block_b, D), lambda i: (i, 0)),
                     pl.BlockSpec((block_b, D), lambda i: (i, 0))]
                    + [pl.BlockSpec(w.shape, lambda i: (0, 0))
                       for w in weight_args])
        out_specs = pl.BlockSpec((block_b, 1), lambda i: (i, 0))
        out = pl.pallas_call(
            kernel,
            out_shape=jax.ShapeDtypeStruct((Bp, 1), jnp.float32),
            grid=grid,
            in_specs=in_specs, out_specs=out_specs,
            compiler_params=pltpu.CompilerParams(
                dimension_semantics=("parallel",)),
        )(z0, z1, *weight_args)
        out = out[:B]
    else:
        # Small batch: whole problem in one grid step, everything in VMEM.
        in_specs = [pl.BlockSpec(memory_space=pltpu.MemorySpace.VMEM)
                    for _ in range(2 + len(weight_args))]
        out = pl.pallas_call(
            kernel,
            out_shape=jax.ShapeDtypeStruct((B, 1), jnp.float32),
            in_specs=in_specs,
            out_specs=pl.BlockSpec(memory_space=pltpu.MemorySpace.VMEM),
        )(z0, z1, *weight_args)

    return jnp.squeeze(out)


# ----------------------------------------------------------------------------
# Plain-JAX reference for validation.
# ----------------------------------------------------------------------------
def contrastive_forward_ref(z0, z1, params):
    h = jnp.concatenate([z0, z1], axis=-1)
    n = len(params)
    for i, (w, b) in enumerate(params):
        h = h @ w + b
        if i < n - 1:
            h = jnp.tanh(h)
    return jnp.squeeze(jax.nn.sigmoid(h))


if __name__ == "__main__":
    key = jax.random.PRNGKey(0)
    k0, k1, kp = jax.random.split(key, 3)

    # batch=2, n_latent_dims=4, n_hidden_layers=1, n_units_per_layer=32
    B, D, H = 2, 4, 32
    z0 = jax.random.normal(k0, (B, D), jnp.float32)
    z1 = jax.random.normal(k1, (B, D), jnp.float32)
    params = init_contrastive_params(kp, n_latent_dims=D,
                                     n_hidden_layers=1, n_units_per_layer=H)

    out = jax.jit(lambda a, b: contrastive_forward(a, b, params))(z0, z1)
    out = jax.block_until_ready(out)

    ref = jax.block_until_ready(contrastive_forward_ref(z0, z1, params))

    assert out.shape == ref.shape == (B,), (out.shape, ref.shape)
    assert bool(jnp.all(jnp.isfinite(out))), out
    assert bool(jnp.allclose(out, ref, rtol=1e-5, atol=1e-5)), (out, ref)
    print("KERNEL_OK")
</pallas_src>

<mosaic_0001>
module attributes {stable_mosaic.version = 11 : i64} {
  func.func @kernel(%arg0: memref<2x4xf32, #tpu.memory_space<vmem>>, %arg1: memref<2x4xf32, #tpu.memory_space<vmem>>, %arg2: memref<4x32xf32, #tpu.memory_space<vmem>>, %arg3: memref<4x32xf32, #tpu.memory_space<vmem>>, %arg4: memref<1x32xf32, #tpu.memory_space<vmem>>, %arg5: memref<1x32xf32, #tpu.memory_space<vmem>>, %arg6: memref<1x1xf32, #tpu.memory_space<vmem>>, %arg7: memref<2x1xf32, #tpu.memory_space<vmem>>) attributes {dimension_semantics = [], scalar_prefetch = 0 : i64, scratch_operands = 0 : i64, tpu.core_type = #tpu.core_type<tc>} {
    %c0 = arith.constant 0 : index
    %c0_0 = arith.constant 0 : index
    %0 = vector.load %arg0[%c0, %c0_0] : memref<2x4xf32, #tpu.memory_space<vmem>>, vector<2x4xf32>
    %c0_1 = arith.constant 0 : index
    %c0_2 = arith.constant 0 : index
    %1 = vector.load %arg1[%c0_1, %c0_2] : memref<2x4xf32, #tpu.memory_space<vmem>>, vector<2x4xf32>
    %c0_3 = arith.constant 0 : index
    %c0_4 = arith.constant 0 : index
    %2 = vector.load %arg2[%c0_3, %c0_4] : memref<4x32xf32, #tpu.memory_space<vmem>>, vector<4x32xf32>
    %c0_5 = arith.constant 0 : index
    %c0_6 = arith.constant 0 : index
    %3 = vector.load %arg3[%c0_5, %c0_6] : memref<4x32xf32, #tpu.memory_space<vmem>>, vector<4x32xf32>
    %c0_7 = arith.constant 0 : index
    %c0_8 = arith.constant 0 : index
    %4 = vector.load %arg4[%c0_7, %c0_8] : memref<1x32xf32, #tpu.memory_space<vmem>>, vector<1x32xf32>
    %cst = arith.constant dense<0.000000e+00> : vector<2x32xf32>
    %5 = tpu.matmul %0, %2, %cst {dimension_numbers = #tpu.dot_dimension_numbers<[1], [0], [0], [1], [0, 0, 1, 1], [], []>, precision = #tpu.contract_precision<fp32>} : vector<2x4xf32>, vector<4x32xf32>, vector<2x32xf32> -> vector<2x32xf32>
    %cst_9 = arith.constant dense<0.000000e+00> : vector<2x32xf32>
    %6 = tpu.matmul %1, %3, %cst_9 {dimension_numbers = #tpu.dot_dimension_numbers<[1], [0], [0], [1], [0, 0, 1, 1], [], []>, precision = #tpu.contract_precision<fp32>} : vector<2x4xf32>, vector<4x32xf32>, vector<2x32xf32> -> vector<2x32xf32>
    %7 = arith.addf %5, %6 : vector<2x32xf32>
    %8 = vector.broadcast %4 : vector<1x32xf32> to vector<2x32xf32>
    %9 = arith.addf %7, %8 : vector<2x32xf32>
    %10 = math.tanh %9 : vector<2x32xf32>
    %c0_10 = arith.constant 0 : index
    %c0_11 = arith.constant 0 : index
    %11 = vector.load %arg5[%c0_10, %c0_11] : memref<1x32xf32, #tpu.memory_space<vmem>>, vector<1x32xf32>
    %c0_12 = arith.constant 0 : index
    %c0_13 = arith.constant 0 : index
    %12 = vector.load %arg6[%c0_12, %c0_13] : memref<1x1xf32, #tpu.memory_space<vmem>>, vector<1x1xf32>
    %13 = vector.broadcast %11 : vector<1x32xf32> to vector<2x32xf32>
    %14 = arith.mulf %10, %13 : vector<2x32xf32>
    %cst_14 = arith.constant dense<0.000000e+00> : vector<2xf32>
    %15 = vector.multi_reduction <add>, %14, %cst_14 [1] : vector<2x32xf32> to vector<2xf32>
    %16 = vector.shape_cast %15 : vector<2xf32> to vector<2x1xf32>
    %17 = vector.broadcast %12 : vector<1x1xf32> to vector<2x1xf32>
    %18 = arith.addf %16, %17 : vector<2x1xf32>
    %cst_15 = arith.constant 0.000000e+00 : f32
    %19 = vector.broadcast %cst_15 : f32 to vector<2x1xf32>
    %20 = arith.subf %19, %18 : vector<2x1xf32>
    %21 = math.exp %20 : vector<2x1xf32>
    %cst_16 = arith.constant 1.000000e+00 : f32
    %22 = vector.broadcast %cst_16 : f32 to vector<2x1xf32>
    %23 = arith.addf %22, %21 : vector<2x1xf32>
    %cst_17 = arith.constant 1.000000e+00 : f32
    %24 = vector.broadcast %cst_17 : f32 to vector<2x1xf32>
    %25 = arith.divf %24, %23 : vector<2x1xf32>
    %c0_18 = arith.constant 0 : index
    %c0_19 = arith.constant 0 : index
    %26 = vector.load %arg7[%c0_18, %c0_19] : memref<2x1xf32, #tpu.memory_space<vmem>>, vector<2x1xf32>
    tpu.vector_store %arg7[%c0_18, %c0_19], %25 {strides = array<i32>} : memref<2x1xf32, #tpu.memory_space<vmem>>, vector<2x1xf32>,
    return
  }
}

</mosaic_0001>

<llo_original>
// kernel: _lambda_.1
$region0: #{_lambda_.1}
  #allocation0 [shape = 'u32[]', space=smem, size = 0x4, offset = 0x4, fixed_abs, tag = 'smem constant byte address 0x4 - core index']
  #allocation1 [shape = 'u32[72,128]{1,0:T(1,128)}', space=vmem, size = 0x9000, scoped, tag = 'internal scratch']
  #allocation2 [shape = 'f32[1,1]{1,0:T(1,128)S(1)}', space=vmem, size = 0x200, scoped, tag = 'scoped memory for _lambda_.1']
  %s0 = inlined_call_operand.hbm [shape: f32[2,4], index: 0, kind: input, shape index: {}]
  %s1 = inlined_call_operand.hbm [shape: f32[2,4], index: 1, kind: input, shape index: {}]
  %s2 = inlined_call_operand.hbm [shape: f32[4,32], index: 2, kind: input, shape index: {}]
  %s3 = inlined_call_operand.hbm [shape: f32[4,32], index: 3, kind: input, shape index: {}]
  %s4 = inlined_call_operand.vmem [shape: f32[1,32], index: 4, kind: input, shape index: {}]
  %s5 = inlined_call_operand.vmem [shape: f32[1,32], index: 5, kind: input, shape index: {}]
  %s6 = inlined_call_operand.<no memory space> [shape: f32[1,1], index: 6, kind: input, shape index: {}]
  %s7 = inlined_call_operand.vmem [shape: f32[2,1], index: 7, kind: output, shape index: {}]
  %s8 = sld [smem:[#allocation0]]
  $region54: #{_lambda_.1} parent=0
    _
  %s10 = ssub.s32 1, %s8
  %s11 = scalar_select 0, %s10, %s8
  %v12 = vstv %s6
  %13 = vst [vmem:[#allocation2] sm:$0x1] %v12
  $region1: #{_lambda_.1} parent=0
    #allocation3 [shape = 'u8[1024]{0}', space=vmem, size = 0x400, scoped, tag = 'input window, operand 0, single buffered']
    #allocation4 [shape = 's32[1]{0}', space=sflag, size = 0x4, scoped, tag = 'scoped memory for _lambda_.1']
    #allocation5 [shape = 'u8[1024]{0}', space=vmem, size = 0x400, scoped, tag = 'input window, operand 1, single buffered']
    #allocation6 [shape = 's32[1]{0}', space=sflag, size = 0x4, scoped, tag = 'scoped memory for _lambda_.1']
    #allocation7 [shape = 'u8[2048]{0}', space=vmem, size = 0x800, scoped, tag = 'input window, operand 2, single buffered']
    #allocation8 [shape = 'u8[2048]{0}', space=vmem, size = 0x800, scoped, tag = 'input window, operand 3, single buffered']
    #allocation9 [shape = 's32[1]{0}', space=sflag, size = 0x4, scoped, tag = 'scoped memory for _lambda_.1']
    %14 = vsyncpa [#allocation4], 0
    %15 = vsyncpa [#allocation6], 0
    %16 = vsyncpa [#allocation9], 0
    // Predicated region
    $region2: #{_lambda_.1} parent=1 // pred_check
      _
    $region3: #{_lambda_.1} parent=1 // pred_check_branch
      %18 = sbr.rel (0) target = $region5
    $region4: #{_lambda_.1} parent=1 // pred_region
      %20 = vsyncadd [#allocation4], 0
      %s22 = sshll.u32 %s0, 4
      %s23 = int_to_ptr.hbm [resolvable:$true] %s22
      %s24 = sshll.u32 [#allocation3], 4
      %s25 = int_to_ptr.vmem [resolvable:$true] %s24
      %27 = dma.hbm_to_vmem [thread:$0]  %s23, 32, %s25, [#allocation4]
    $region5: #{_lambda_.1} parent=1 // pred_fallthru
      _
    // Predicated region
    $region6: #{_lambda_.1} parent=1 // pred_check
      _
    $region7: #{_lambda_.1} parent=1 // pred_check_branch
      %29 = sbr.rel (0) target = $region9
    $region8: #{_lambda_.1} parent=1 // pred_region
      %31 = vsyncadd [#allocation6], 0
      %s33 = sshll.u32 %s1, 4
      %s34 = int_to_ptr.hbm [resolvable:$true] %s33
      %s35 = sshll.u32 [#allocation5], 4
      %s36 = int_to_ptr.vmem [resolvable:$true] %s35
      %38 = dma.hbm_to_vmem [thread:$0]  %s34, 32, %s36, [#allocation6]
    $region9: #{_lambda_.1} parent=1 // pred_fallthru
      _
    // Predicated region
    $region10: #{_lambda_.1} parent=1 // pred_check
      _
    $region11: #{_lambda_.1} parent=1 // pred_check_branch
      %40 = sbr.rel (0) target = $region13
    $region12: #{_lambda_.1} parent=1 // pred_region
      %42 = vsyncadd [#allocation6], 0
      %s44 = sshll.u32 %s2, 4
      %s45 = int_to_ptr.hbm [resolvable:$true] %s44
      %s46 = sshll.u32 [#allocation7], 4
      %s47 = int_to_ptr.vmem [resolvable:$true] %s46
      %49 = dma.hbm_to_vmem [thread:$0]  %s45, 64, %s47, [#allocation6]
    $region13: #{_lambda_.1} parent=1 // pred_fallthru
      _
    // Predicated region
    $region14: #{_lambda_.1} parent=1 // pred_check
      _
    $region15: #{_lambda_.1} parent=1 // pred_check_branch
      %51 = sbr.rel (0) target = $region17
    $region16: #{_lambda_.1} parent=1 // pred_region
      %53 = vsyncadd [#allocation9], 0
      %s55 = sshll.u32 %s3, 4
      %s56 = int_to_ptr.hbm [resolvable:$true] %s55
      %s57 = sshll.u32 [#allocation8], 4
      %s58 = int_to_ptr.vmem [resolvable:$true] %s57
      %60 = dma.hbm_to_vmem [thread:$0]  %s56, 64, %s58, [#allocation9]
    $region17: #{_lambda_.1} parent=1 // pred_fallthru
      _
    // Predicated region
    $region18: #{_lambda_.1} parent=1 // pred_check
      _
    $region19: #{_lambda_.1} parent=1 // pred_check_branch
      %62 = sbr.rel (0) target = $region21
    $region20: #{_lambda_.1} parent=1 // pred_region
      _
    $region21: #{_lambda_.1} parent=1 // pred_fallthru
      _
    // Predicated region
    $region22: #{_lambda_.1} parent=1 // pred_check
      _
    $region23: #{_lambda_.1} parent=1 // pred_check_branch
      %64 = sbr.rel (0) target = $region25
    $region24: #{_lambda_.1} parent=1 // pred_region
      _
    $region25: #{_lambda_.1} parent=1 // pred_fallthru
      _
    // Predicated region
    $region26: #{_lambda_.1} parent=1 // pred_check
      _
    $region27: #{_lambda_.1} parent=1 // pred_check_branch
      %66 = sbr.rel (0) target = $region29
    $region28: #{_lambda_.1} parent=1 // pred_region
      _
    $region29: #{_lambda_.1} parent=1 // pred_fallthru
      _
    // Predicated region
    $region30: #{_lambda_.1} parent=1 // pred_check
      _
    $region31: #{_lambda_.1} parent=1 // pred_check_branch
      %68 = sbr.rel (0) target = $region33
    $region32: #{_lambda_.1} parent=1 // pred_region
      %70 = dma.done [#allocation4], 32
    $region33: #{_lambda_.1} parent=1 // pred_fallthru
      _
    // Predicated region
    $region34: #{_lambda_.1} parent=1 // pred_check
      _
    $region35: #{_lambda_.1} parent=1 // pred_check_branch
      %72 = sbr.rel (0) target = $region37
    $region36: #{_lambda_.1} parent=1 // pred_region
      %74 = dma.done [#allocation6], 32
    $region37: #{_lambda_.1} parent=1 // pred_fallthru
      _
    // Predicated region
    $region38: #{_lambda_.1} parent=1 // pred_check
      _
    $region39: #{_lambda_.1} parent=1 // pred_check_branch
      %76 = sbr.rel (0) target = $region41
    $region40: #{_lambda_.1} parent=1 // pred_region
      %78 = dma.done [#allocation6], 64
    $region41: #{_lambda_.1} parent=1 // pred_fallthru
      _
    // Predicated region
    $region42: #{_lambda_.1} parent=1 // pred_check
      _
    $region43: #{_lambda_.1} parent=1 // pred_check_branch
      %80 = sbr.rel (0) target = $region45
    $region44: #{_lambda_.1} parent=1 // pred_region
      %82 = dma.done [#allocation9], 64
    $region45: #{_lambda_.1} parent=1 // pred_fallthru
      _
    %v83 = vld [vmem:[#allocation3] sm:$0x3]
    %v84 = vld [vmem:[#allocation5] sm:$0x3]
    %v85 = vld [vmem:[#allocation7] sm:$0xf]
    %v86 = vld [vmem:[#allocation8] sm:$0xf]
    %v87 = vld [vmem:[%s4] sm:$0x1]
    %vm88 = vcmask 31744
    %v90 = vsel %vm88, %v84, 0
    %vm92 = vcmask 1043456
    %v94 = vsel %vm92, %v86, 0
    %96 = vmatpush.msra.mxu0 0.0
    %97 = vmatpush.msra.mxu0 0.0
    %98 = vmatpush.msra.mxu0 0.0
    %99 = vmatpush.msra.mxu0 0.0
    %100 = vmatpush.msra.mxu0 0.0
    %101 = vmatpush.msra.mxu0 0.0
    %102 = vmatpush.msra.mxu0 0.0
    %103 = vmatpush.msra.mxu0 0.0
    %104 = vmatpush.msra.mxu0 0.0
    %105 = vmatpush.msra.mxu0 0.0
    %106 = vmatpush.msra.mxu0 0.0
    %107 = vmatpush.msra.mxu0 0.0
    %108 = vmatpush.msra.mxu0 0.0
    %109 = vmatpush.msra.mxu0 0.0
    %110 = vmatpush.msra.mxu0 0.0
    %v111 = vand.u32 %v94, 4294901760
    %112 = vmatpush.msra.mxu0 %v111
    %v113 = vand.u32 %v90, 4294901760
    %v114 = vsub.f32 %v90, %v113
    %v115 = vand.u32 %v114, 4294901760
    %v116 = vsub.f32 %v114, %v115
    %v117 = vand.u32 %v116, 4294901760
    %118 = vmatmul.f32.gmra.mxu0 %v117
    %v119 = vpop.f32.mrf.mxu0
    %v120 = vadd.f32 0.0, %v119
    %121 = vdwg.mxu0
    %122 = vmatpush.msra.mxu0 0.0
    %123 = vmatpush.msra.mxu0 0.0
    %124 = vmatpush.msra.mxu0 0.0
    %125 = vmatpush.msra.mxu0 0.0
    %126 = vmatpush.msra.mxu0 0.0
    %127 = vmatpush.msra.mxu0 0.0
    %128 = vmatpush.msra.mxu0 0.0
    %129 = vmatpush.msra.mxu0 0.0
    %130 = vmatpush.msra.mxu0 0.0
    %131 = vmatpush.msra.mxu0 0.0
    %132 = vmatpush.msra.mxu0 0.0
    %133 = vmatpush.msra.mxu0 0.0
    %134 = vmatpush.msra.mxu0 0.0
    %135 = vmatpush.msra.mxu0 0.0
    %136 = vmatpush.msra.mxu0 0.0
    %v137 = vand.u32 %v94, 4294901760
    %v138 = vsub.f32 %v94, %v137
    %v139 = vand.u32 %v138, 4294901760
    %v140 = vsub.f32 %v138, %v139
    %v141 = vand.u32 %v140, 4294901760
    %142 = vmatpush.msra.mxu0 %v141
    %v143 = vand.u32 %v90, 4294901760
    %144 = vmatmul.f32.gmra.mxu0 %v143
    %v145 = vpop.f32.mrf.mxu0
    %v146 = vadd.f32 %v120, %v145
    %147 = vdwg.mxu0
    %148 = vmatpush.msra.mxu0 0.0
    %149 = vmatpush.msra.mxu0 0.0
    %150 = vmatpush.msra.mxu0 0.0
    %151 = vmatpush.msra.mxu0 0.0
    %152 = vmatpush.msra.mxu0 0.0
    %153 = vmatpush.msra.mxu0 0.0
    %154 = vmatpush.msra.mxu0 0.0
    %155 = vmatpush.msra.mxu0 0.0
    %156 = vmatpush.msra.mxu0 0.0
    %157 = vmatpush.msra.mxu0 0.0
    %158 = vmatpush.msra.mxu0 0.0
    %159 = vmatpush.msra.mxu0 0.0
    %160 = vmatpush.msra.mxu0 0.0
    %161 = vmatpush.msra.mxu0 0.0
    %162 = vmatpush.msra.mxu0 0.0
    %v163 = vand.u32 %v94, 4294901760
    %v164 = vsub.f32 %v94, %v163
    %165 = vmatpush.msra.mxu0 %v164
    %v166 = vand.u32 %v90, 4294901760
    %v167 = vsub.f32 %v90, %v166
    %168 = vmatmul.f32.gmra.mxu0 %v167
    %v169 = vpop.f32.mrf.mxu0
    %v170 = vadd.f32 %v146, %v169
    %171 = vdwg.mxu0
    %172 = vmatpush.msra.mxu0 0.0
    %173 = vmatpush.msra.mxu0 0.0
    %174 = vmatpush.msra.mxu0 0.0
    %175 = vmatpush.msra.mxu0 0.0
    %176 = vmatpush.msra.mxu0 0.0
    %177 = vmatpush.msra.mxu0 0.0
    %178 = vmatpush.msra.mxu0 0.0
    %179 = vmatpush.msra.mxu0 0.0
    %180 = vmatpush.msra.mxu0 0.0
    %181 = vmatpush.msra.mxu0 0.0
    %182 = vmatpush.msra.mxu0 0.0
    %183 = vmatpush.msra.mxu0 0.0
    %184 = vmatpush.msra.mxu0 0.0
    %185 = vmatpush.msra.mxu0 0.0
    %186 = vmatpush.msra.mxu0 0.0
    %v187 = vand.u32 %v94, 4294901760
    %188 = vmatpush.msra.mxu0 %v187
    %v189 = vand.u32 %v90, 4294901760
    %v190 = vsub.f32 %v90, %v189
    %v191 = vand.u32 %v190, 4294901760
    %192 = vmatmul.f32.gmra.mxu0 %v191
    %v193 = vpop.f32.mrf.mxu0
    %v194 = vadd.f32 %v170, %v193
    %195 = vdwg.mxu0
    %196 = vmatpush.msra.mxu0 0.0
    %197 = vmatpush.msra.mxu0 0.0
    %198 = vmatpush.msra.mxu0 0.0
    %199 = vmatpush.msra.mxu0 0.0
    %200 = vmatpush.msra.mxu0 0.0
    %201 = vmatpush.msra.mxu0 0.0
    %202 = vmatpush.msra.mxu0 0.0
    %203 = vmatpush.msra.mxu0 0.0
    %204 = vmatpush.msra.mxu0 0.0
    %205 = vmatpush.msra.mxu0 0.0
    %206 = vmatpush.msra.mxu0 0.0
    %207 = vmatpush.msra.mxu0 0.0
    %208 = vmatpush.msra.mxu0 0.0
    %209 = vmatpush.msra.mxu0 0.0
    %210 = vmatpush.msra.mxu0 0.0
    %v211 = vand.u32 %v94, 4294901760
    %v212 = vsub.f32 %v94, %v211
    %v213 = vand.u32 %v212, 4294901760
    %214 = vmatpush.msra.mxu0 %v213
    %v215 = vand.u32 %v90, 4294901760
    %216 = vmatmul.f32.gmra.mxu0 %v215
    %v217 = vpop.f32.mrf.mxu0
    %v218 = vadd.f32 %v194, %v217
    %219 = vdwg.mxu0
    %220 = vmatpush.msra.mxu0 0.0
    %221 = vmatpush.msra.mxu0 0.0
    %222 = vmatpush.msra.mxu0 0.0
    %223 = vmatpush.msra.mxu0 0.0
    %224 = vmatpush.msra.mxu0 0.0
    %225 = vmatpush.msra.mxu0 0.0
    %226 = vmatpush.msra.mxu0 0.0
    %227 = vmatpush.msra.mxu0 0.0
    %228 = vmatpush.msra.mxu0 0.0
    %229 = vmatpush.msra.mxu0 0.0
    %230 = vmatpush.msra.mxu0 0.0
    %231 = vmatpush.msra.mxu0 0.0
    %232 = vmatpush.msra.mxu0 0.0
    %233 = vmatpush.msra.mxu0 0.0
    %234 = vmatpush.msra.mxu0 0.0
    %v235 = vand.u32 %v94, 4294901760
    %236 = vmatpush.msra.mxu0 %v235
    %v237 = vand.u32 %v90, 4294901760
    %238 = vmatmul.f32.gmra.mxu0 %v237
    %v239 = vpop.f32.mrf.mxu0
    %v240 = vadd.f32 %v218, %v239
    %241 = vdwg.mxu0
    %v243 = vsel %vm88, %v83, 0
    %v246 = vsel %vm92, %v85, 0
    %248 = vmatpush.msra.mxu0 0.0
    %249 = vmatpush.msra.mxu0 0.0
    %250 = vmatpush.msra.mxu0 0.0
    %251 = vmatpush.msra.mxu0 0.0
    %252 = vmatpush.msra.mxu0 0.0
    %253 = vmatpush.msra.mxu0 0.0
    %254 = vmatpush.msra.mxu0 0.0
    %255 = vmatpush.msra.mxu0 0.0
    %256 = vmatpush.msra.mxu0 0.0
    %257 = vmatpush.msra.mxu0 0.0
    %258 = vmatpush.msra.mxu0 0.0
    %259 = vmatpush.msra.mxu0 0.0
    %260 = vmatpush.msra.mxu0 0.0
    %261 = vmatpush.msra.mxu0 0.0
    %262 = vmatpush.msra.mxu0 0.0
    %v263 = vand.u32 %v246, 4294901760
    %264 = vmatpush.msra.mxu0 %v263
    %v265 = vand.u32 %v243, 4294901760
    %v266 = vsub.f32 %v243, %v265
    %v267 = vand.u32 %v266, 4294901760
    %v268 = vsub.f32 %v266, %v267
    %v269 = vand.u32 %v268, 4294901760
    %270 = vmatmul.f32.gmra.mxu0 %v269
    %v271 = vpop.f32.mrf.mxu0
    %v272 = vadd.f32 %v240, %v271
    %273 = vdwg.mxu0
    %274 = vmatpush.msra.mxu0 0.0
    %275 = vmatpush.msra.mxu0 0.0
    %276 = vmatpush.msra.mxu0 0.0
    %277 = vmatpush.msra.mxu0 0.0
    %278 = vmatpush.msra.mxu0 0.0
    %279 = vmatpush.msra.mxu0 0.0
    %280 = vmatpush.msra.mxu0 0.0
    %281 = vmatpush.msra.mxu0 0.0
    %282 = vmatpush.msra.mxu0 0.0
    %283 = vmatpush.msra.mxu0 0.0
    %284 = vmatpush.msra.mxu0 0.0
    %285 = vmatpush.msra.mxu0 0.0
    %286 = vmatpush.msra.mxu0 0.0
    %287 = vmatpush.msra.mxu0 0.0
    %288 = vmatpush.msra.mxu0 0.0
    %v289 = vand.u32 %v246, 4294901760
    %v290 = vsub.f32 %v246, %v289
    %v291 = vand.u32 %v290, 4294901760
    %v292 = vsub.f32 %v290, %v291
    %v293 = vand.u32 %v292, 4294901760
    %294 = vmatpush.msra.mxu0 %v293
    %v295 = vand.u32 %v243, 4294901760
    %296 = vmatmul.f32.gmra.mxu0 %v295
    %v297 = vpop.f32.mrf.mxu0
    %v298 = vadd.f32 %v272, %v297
    %299 = vdwg.mxu0
    %300 = vmatpush.msra.mxu0 0.0
    %301 = vmatpush.msra.mxu0 0.0
    %302 = vmatpush.msra.mxu0 0.0
    %303 = vmatpush.msra.mxu0 0.0
    %304 = vmatpush.msra.mxu0 0.0
    %305 = vmatpush.msra.mxu0 0.0
    %306 = vmatpush.msra.mxu0 0.0
    %307 = vmatpush.msra.mxu0 0.0
    %308 = vmatpush.msra.mxu0 0.0
    %309 = vmatpush.msra.mxu0 0.0
    %310 = vmatpush.msra.mxu0 0.0
    %311 = vmatpush.msra.mxu0 0.0
    %312 = vmatpush.msra.mxu0 0.0
    %313 = vmatpush.msra.mxu0 0.0
    %314 = vmatpush.msra.mxu0 0.0
    %v315 = vand.u32 %v246, 4294901760
    %v316 = vsub.f32 %v246, %v315
    %317 = vmatpush.msra.mxu0 %v316
    %v318 = vand.u32 %v243, 4294901760
    %v319 = vsub.f32 %v243, %v318
    %320 = vmatmul.f32.gmra.mxu0 %v319
    %v321 = vpop.f32.mrf.mxu0
    %v322 = vadd.f32 %v298, %v321
    %323 = vdwg.mxu0
    %324 = vmatpush.msra.mxu0 0.0
    %325 = vmatpush.msra.mxu0 0.0
    %326 = vmatpush.msra.mxu0 0.0
    %327 = vmatpush.msra.mxu0 0.0
    %328 = vmatpush.msra.mxu0 0.0
    %329 = vmatpush.msra.mxu0 0.0
    %330 = vmatpush.msra.mxu0 0.0
    %331 = vmatpush.msra.mxu0 0.0
    %332 = vmatpush.msra.mxu0 0.0
    %333 = vmatpush.msra.mxu0 0.0
    %334 = vmatpush.msra.mxu0 0.0
    %335 = vmatpush.msra.mxu0 0.0
    %336 = vmatpush.msra.mxu0 0.0
    %337 = vmatpush.msra.mxu0 0.0
    %338 = vmatpush.msra.mxu0 0.0
    %v339 = vand.u32 %v246, 4294901760
    %340 = vmatpush.msra.mxu0 %v339
    %v341 = vand.u32 %v243, 4294901760
    %v342 = vsub.f32 %v243, %v341
    %v343 = vand.u32 %v342, 4294901760
    %344 = vmatmul.f32.gmra.mxu0 %v343
    %v345 = vpop.f32.mrf.mxu0
    %v346 = vadd.f32 %v322, %v345
    %347 = vdwg.mxu0
    %348 = vmatpush.msra.mxu0 0.0
    %349 = vmatpush.msra.mxu0 0.0
    %350 = vmatpush.msra.mxu0 0.0
    %351 = vmatpush.msra.mxu0 0.0
    %352 = vmatpush.msra.mxu0 0.0
    %353 = vmatpush.msra.mxu0 0.0
    %354 = vmatpush.msra.mxu0 0.0
    %355 = vmatpush.msra.mxu0 0.0
    %356 = vmatpush.msra.mxu0 0.0
    %357 = vmatpush.msra.mxu0 0.0
    %358 = vmatpush.msra.mxu0 0.0
    %359 = vmatpush.msra.mxu0 0.0
    %360 = vmatpush.msra.mxu0 0.0
    %361 = vmatpush.msra.mxu0 0.0
    %362 = vmatpush.msra.mxu0 0.0
    %v363 = vand.u32 %v246, 4294901760
    %v364 = vsub.f32 %v246, %v363
    %v365 = vand.u32 %v364, 4294901760
    %366 = vmatpush.msra.mxu0 %v365
    %v367 = vand.u32 %v243, 4294901760
    %368 = vmatmul.f32.gmra.mxu0 %v367
    %v369 = vpop.f32.mrf.mxu0
    %v370 = vadd.f32 %v346, %v369
    %371 = vdwg.mxu0
    %372 = vmatpush.msra.mxu0 0.0
    %373 = vmatpush.msra.mxu0 0.0
    %374 = vmatpush.msra.mxu0 0.0
    %375 = vmatpush.msra.mxu0 0.0
    %376 = vmatpush.msra.mxu0 0.0
    %377 = vmatpush.msra.mxu0 0.0
    %378 = vmatpush.msra.mxu0 0.0
    %379 = vmatpush.msra.mxu0 0.0
    %380 = vmatpush.msra.mxu0 0.0
    %381 = vmatpush.msra.mxu0 0.0
    %382 = vmatpush.msra.mxu0 0.0
    %383 = vmatpush.msra.mxu0 0.0
    %384 = vmatpush.msra.mxu0 0.0
    %385 = vmatpush.msra.mxu0 0.0
    %386 = vmatpush.msra.mxu0 0.0
    %v387 = vand.u32 %v246, 4294901760
    %388 = vmatpush.msra.mxu0 %v387
    %v389 = vand.u32 %v243, 4294901760
    %390 = vmatmul.f32.gmra.mxu0 %v389
    %v391 = vpop.f32.mrf.mxu0
    %v392 = vadd.f32 %v370, %v391
    %393 = vdwg.mxu0
    %v395 = vperm.slane %v87, 0
    %v397 = vadd.f32 %v392, %v395
    %v398 = vtanh.pop %v397
    %v399 = vld [vmem:[%s5] sm:$0x1]
    %v400 = vld [vmem:[#allocation2] sm:$0x1]
    %v402 = vperm.slane %v399, 0
    %v404 = vmul.f32 %v398, %v402
    %vm405 = vcmask 254976
    %v406 = vsel %vm405, %v404, 0.0
    %407 = vadd.xlane.f32.xlu0 %v406
    %v408 = vpop.xlane.xlu0 %407
    %v410 = vperm.slane %v400, 0
    %v412 = vadd.f32 %v408, %v410
    %v413 = vsub.f32 0.0, %v412
    %v414 = vmul.f32 %v413, 1.442695
    %v415 = vpow.pop %v414
    %v416 = vadd.f32 %v415, 1.0
    %v417 = vrcp.pop %v416
    %v418 = vmul.f32 %v416, %v417
    %v419 = vsub.f32 1.0, %v418
    %v420 = vmul.f32 %v417, %v419
    %v421 = vadd.f32 %v417, %v420
    %vm422 = vweird.f32 %v416
    %vm423 = vweird.f32 %v417
    %vm424 = vmor %vm422, %vm423
    %v425 = vsel %vm424, %v417, %v421
    %v426 = vand.u32 2147483647, %v416
    %vm427 = vcmp.eq.f32.partialorder %v426, 8.507059e+37
    %v428 = vand.u32 %v416, 2147483648
    %v429 = vor.u32 1.1754944e-38, %v428
    %v430 = vsel %vm427, %v429, %v425
    %v431 = vmul.f32 1.0, %v430
    %vm432 = vcmask 1024
    %433 = vst.msk [vmem:[%s7] sm:$0x3] %vm432, %v431
    // Predicated region
    $region46: #{_lambda_.1} parent=1 // pred_check
      _
    $region47: #{_lambda_.1} parent=1 // pred_check_branch
      %435 = sbr.rel (0) target = $region49
    $region48: #{_lambda_.1} parent=1 // pred_region
      _
    $region49: #{_lambda_.1} parent=1 // pred_fallthru
      _
    // Predicated region
    $region50: #{_lambda_.1} parent=1 // pred_check
      _
    $region51: #{_lambda_.1} parent=1 // pred_check_branch
      %437 = sbr.rel (0) target = $region53
    $region52: #{_lambda_.1} parent=1 // pred_region
      _
    $region53: #{_lambda_.1} parent=1 // pred_fallthru
      _
    %438 = vsyncpa [#allocation4], 1
    %439 = vsyncpa [#allocation6], 1
    %440 = vsyncpa [#allocation9], 1

</llo_original>
